<compile_context>
chip_gen: v5e
topology: v5e:2x2
jax: 0.10.0
libtpu: 0.0.40
codegen_flags: <defaults>
</compile_context>

<pallas_src>
import functools

import jax
import jax.numpy as jnp
from jax.experimental import pallas as pl
from jax.experimental.pallas import tpu as pltpu


def _round_up(x, m):
    return ((x + m - 1) // m) * m


def _gce_kernel(x_ref, t_ref, o_ref, *, n_valid_last, needs_mask):
    """One batch tile.

    x_ref: (4, tile_r, 128) logits, class-major (batch on sublanes + lanes)
    t_ref: (tile_r, 128) int32 targets
    o_ref: (1, 128) f32 per-lane partial sums of per-sample NLL for this tile
    """
    x0 = x_ref[0].astype(jnp.float32)          # (tile_r, 128)
    x1 = x_ref[1].astype(jnp.float32)
    x2 = x_ref[2].astype(jnp.float32)
    x3 = x_ref[3].astype(jnp.float32)
    t = t_ref[...]                             # (tile_r, 128) int32

    # Numerically stable log-sum-exp over the 4 classes: pairwise VPU max,
    # 4 lane+sublane-dense EUP exps, 1 EUP log, a few VPU adds.
    m = jnp.maximum(jnp.maximum(x0, x1), jnp.maximum(x2, x3))
    s = jnp.exp(x0 - m) + jnp.exp(x1 - m) + jnp.exp(x2 - m) + jnp.exp(x3 - m)
    lse = m + jnp.log(s)

    # Correct-class logit via a nested 3-select chain (pure VPU).
    # TODO(synk): targets outside [0, 4) are clamped to class 3 here instead
    # of raising like torch.nn.functional.cross_entropy would.
    correct = jnp.where(t == 0, x0,
              jnp.where(t == 1, x1,
              jnp.where(t == 2, x2, x3)))
    nll = lse - correct                        # (tile_r, 128)

    if not needs_mask:
        # Every sample in every tile is valid: no masking anywhere.
        o_ref[...] = jnp.sum(nll, axis=0, keepdims=True)
    else:
        is_last = pl.program_id(0) == pl.num_programs(0) - 1

        @pl.when(jnp.logical_not(is_last))
        def _():
            o_ref[...] = jnp.sum(nll, axis=0, keepdims=True)

        @pl.when(is_last)
        def _():
            # All padding (lane pad up to 128 and Pallas-padded trailing rows)
            # sits at the tail of the LAST tile; mask it before the reduction
            # so garbage / NaN never reaches the sum.
            row = jax.lax.broadcasted_iota(jnp.int32, nll.shape, 0)
            lane = jax.lax.broadcasted_iota(jnp.int32, nll.shape, 1)
            valid = (row * 128 + lane) < n_valid_last
            o_ref[...] = jnp.sum(jnp.where(valid, nll, 0.0),
                                 axis=0, keepdims=True)


def group_cross_entropy_loss(output, target, *, tile_r=None):
    """output: (N, C) float logits (C >= 4); target: (N,) int in [0, 4)."""
    n, c = output.shape
    if c < 4:
        raise ValueError("GroupCrossEntropyLoss needs at least 4 channels")
    if n == 0:
        # torch's mean reduction over an empty batch yields NaN.
        return jnp.float32(jnp.nan)

    r_total = -(-n // 128)                    # rows of 128 samples
    n_lane_pad = r_total * 128

    # ---- tile selection --------------------------------------------------
    if tile_r is None:
        tile_r = 1024                         # 131072 samples ~ 2 MiB f32 logits/block
        if r_total > 8:
            # Keep the grid >= 2 tiles so v7x's two TensorCores both get work.
            tile_r = min(tile_r, _round_up(-(-r_total // 2), 8))
    tile_r = max(1, int(tile_r))
    if tile_r < r_total:
        tile_r = _round_up(tile_r, 8)         # (8,128) sublane rule for partial blocks
    tile_r = min(tile_r, r_total)             # block == full dim is always legal
    num_tiles = -(-r_total // tile_r)

    n_valid_last = n - (num_tiles - 1) * tile_r * 128
    needs_mask = n_valid_last < tile_r * 128

    # ---- repack: class-major, sublane+lane dense ---------------------------
    # slice -> (pad to a 128 multiple) -> reshape -> transpose; XLA fuses this
    # into one copy pass.  Only the 4 used classes are copied/DMA'd and logits
    # stay in their native dtype (no wrapper f32 cast).
    # TODO(synk): if the producer can emit class-major (4, N) logits directly,
    # this repack pass (an extra HBM read+write of 4*N elements) disappears.
    logits4 = output[:, :4]                    # (N, 4) native dtype
    tgt = target.reshape(n).astype(jnp.int32)
    pad = n_lane_pad - n
    if pad:
        logits4 = jnp.pad(logits4, ((0, pad), (0, 0)))
        tgt = jnp.pad(tgt, ((0, pad),))
    logits = jnp.transpose(logits4.reshape(r_total, 128, 4), (2, 0, 1))  # (4,R,128)
    targets = tgt.reshape(r_total, 128)                                  # (R,128)

    kernel = functools.partial(_gce_kernel,
                               n_valid_last=n_valid_last,
                               needs_mask=needs_mask)

    # ---- compiler params ---------------------------------------------------
    elem = jnp.dtype(output.dtype).itemsize
    block_bytes = tile_r * 128 * (4 * elem + 4)     # logits + int32 targets
    cp = dict(dimension_semantics=("parallel",))
    # Double-buffered inputs can crowd v5e's 16 MiB scoped-VMEM default when
    # tiles are pushed very large; raise the limit explicitly in that case
    # (still far below v7x's 64 MiB physical VMEM).
    if 2 * block_bytes > 12 * 1024 * 1024:
        cp["vmem_limit_bytes"] = min(4 * block_bytes + (1 << 20), 48 << 20)

    partials = pl.pallas_call(
        kernel,
        grid=(num_tiles,),
        out_shape=jax.ShapeDtypeStruct((num_tiles, 128), jnp.float32),
        in_specs=[
            pl.BlockSpec((4, tile_r, 128), lambda i: (0, i, 0)),
            pl.BlockSpec((tile_r, 128), lambda i: (i, 0)),
        ],
        out_specs=pl.BlockSpec((1, 128), lambda i: (i, 0)),
        compiler_params=pltpu.CompilerParams(**cp),
    )(logits, targets)

    # Tiny (num_tiles, 128) tail reduction + mean over the TRUE batch size.
    return jnp.sum(partials) / jnp.float32(n)


def _reference(output, target):
    # Pure-JAX reference of F.cross_entropy(output[:, :4], target), mean.
    logits = output[:, :4].astype(jnp.float32)
    logp = jax.nn.log_softmax(logits, axis=-1)
    nll = -jnp.take_along_axis(logp, target[:, None].astype(jnp.int32), axis=-1)
    return jnp.mean(nll)


if __name__ == "__main__":
    key = jax.random.PRNGKey(0)
    k1, k2, k3, k4, k5, k6 = jax.random.split(key, 6)

    # 1) Small case matching the module layout: batch=8, 12 raw channels
    #    (single tile, lane-masked tail).
    N, C = 8, 12
    output = jax.random.normal(k1, (N, C), dtype=jnp.float32)
    target = jax.random.randint(k2, (N,), 0, 4, dtype=jnp.int32)
    loss = jax.block_until_ready(group_cross_entropy_loss(output, target))
    ref = jax.block_until_ready(_reference(output, target))
    assert jnp.allclose(loss, ref, atol=1e-5, rtol=1e-4), (loss, ref)

    # 2) Multi-tile path with trailing-block padding: 2085 samples -> 17 rows
    #    of 128, tile_r=8 -> 3 tiles; last tile has 37 valid samples plus
    #    Pallas-padded garbage rows that the in-kernel mask removes; the mean
    #    divides by the true N.
    N2 = 2085
    output2 = jax.random.normal(k3, (N2, C), dtype=jnp.float32)
    target2 = jax.random.randint(k4, (N2,), 0, 4, dtype=jnp.int32)
    loss2 = jax.block_until_ready(
        group_cross_entropy_loss(output2, target2, tile_r=8))
    ref2 = jax.block_until_ready(_reference(output2, target2))
    assert jnp.allclose(loss2, ref2, atol=1e-5, rtol=1e-4), (loss2, ref2)

    # 3) Exact-fill path (no masking at all): N = 256 = 2*128.
    N3 = 256
    output3 = jax.random.normal(k5, (N3, C), dtype=jnp.float32)
    target3 = jax.random.randint(k6, (N3,), 0, 4, dtype=jnp.int32)
    loss3 = jax.block_until_ready(group_cross_entropy_loss(output3, target3))
    ref3 = jax.block_until_ready(_reference(output3, target3))
    assert jnp.allclose(loss3, ref3, atol=1e-5, rtol=1e-4), (loss3, ref3)

    print("KERNEL_OK")
</pallas_src>

<mosaic_0001>
module attributes {stable_mosaic.version = 11 : i64} {
  func.func @_gce_kernel(%arg0: i32, %arg1: memref<4x1x128xf32, #tpu.memory_space<vmem>>, %arg2: memref<1x128xi32, #tpu.memory_space<vmem>>, %arg3: memref<1x128xf32, #tpu.memory_space<vmem>>) attributes {dimension_semantics = [#tpu.dimension_semantics<parallel>], iteration_bounds = array<i64: 1>, scalar_prefetch = 0 : i64, scratch_operands = 0 : i64, tpu.core_type = #tpu.core_type<tc>, window_params = [{transform_indices = @transform_0, window_bounds = array<i64: 4, 1, 128>}, {transform_indices = @transform_1, window_bounds = array<i64: 1, 128>}, {transform_indices = @transform_2, window_bounds = array<i64: 1, 128>}]} {
    %c0 = arith.constant 0 : index
    %c0_0 = arith.constant 0 : index
    %c0_1 = arith.constant 0 : index
    %0 = vector.load %arg1[%c0, %c0_0, %c0_1] : memref<4x1x128xf32, #tpu.memory_space<vmem>>, vector<1x1x128xf32>
    %1 = vector.shape_cast %0 : vector<1x1x128xf32> to vector<1x128xf32>
    %c1 = arith.constant 1 : index
    %c0_2 = arith.constant 0 : index
    %c0_3 = arith.constant 0 : index
    %2 = vector.load %arg1[%c1, %c0_2, %c0_3] : memref<4x1x128xf32, #tpu.memory_space<vmem>>, vector<1x1x128xf32>
    %3 = vector.shape_cast %2 : vector<1x1x128xf32> to vector<1x128xf32>
    %c2 = arith.constant 2 : index
    %c0_4 = arith.constant 0 : index
    %c0_5 = arith.constant 0 : index
    %4 = vector.load %arg1[%c2, %c0_4, %c0_5] : memref<4x1x128xf32, #tpu.memory_space<vmem>>, vector<1x1x128xf32>
    %5 = vector.shape_cast %4 : vector<1x1x128xf32> to vector<1x128xf32>
    %c3 = arith.constant 3 : index
    %c0_6 = arith.constant 0 : index
    %c0_7 = arith.constant 0 : index
    %6 = vector.load %arg1[%c3, %c0_6, %c0_7] : memref<4x1x128xf32, #tpu.memory_space<vmem>>, vector<1x1x128xf32>
    %7 = vector.shape_cast %6 : vector<1x1x128xf32> to vector<1x128xf32>
    %c0_8 = arith.constant 0 : index
    %c0_9 = arith.constant 0 : index
    %8 = vector.load %arg2[%c0_8, %c0_9] : memref<1x128xi32, #tpu.memory_space<vmem>>, vector<1x128xi32>
    %9 = arith.maximumf %1, %3 : vector<1x128xf32>
    %10 = arith.maximumf %5, %7 : vector<1x128xf32>
    %11 = arith.maximumf %9, %10 : vector<1x128xf32>
    %12 = arith.subf %1, %11 : vector<1x128xf32>
    %13 = math.exp %12 : vector<1x128xf32>
    %14 = arith.subf %3, %11 : vector<1x128xf32>
    %15 = math.exp %14 : vector<1x128xf32>
    %16 = arith.addf %13, %15 : vector<1x128xf32>
    %17 = arith.subf %5, %11 : vector<1x128xf32>
    %18 = math.exp %17 : vector<1x128xf32>
    %19 = arith.addf %16, %18 : vector<1x128xf32>
    %20 = arith.subf %7, %11 : vector<1x128xf32>
    %21 = math.exp %20 : vector<1x128xf32>
    %22 = arith.addf %19, %21 : vector<1x128xf32>
    %23 = math.log %22 : vector<1x128xf32>
    %24 = arith.addf %11, %23 : vector<1x128xf32>
    %c0_i32 = arith.constant 0 : i32
    %25 = vector.broadcast %c0_i32 : i32 to vector<1x128xi32>
    %26 = arith.cmpi eq, %8, %25 : vector<1x128xi32>
    %c1_i32 = arith.constant 1 : i32
    %27 = vector.broadcast %c1_i32 : i32 to vector<1x128xi32>
    %28 = arith.cmpi eq, %8, %27 : vector<1x128xi32>
    %c2_i32 = arith.constant 2 : i32
    %29 = vector.broadcast %c2_i32 : i32 to vector<1x128xi32>
    %30 = arith.cmpi eq, %8, %29 : vector<1x128xi32>
    %31 = arith.select %30, %5, %7 : vector<1x128xi1>, vector<1x128xf32>
    %32 = arith.select %28, %3, %31 : vector<1x128xi1>, vector<1x128xf32>
    %33 = arith.select %26, %1, %32 : vector<1x128xi1>, vector<1x128xf32>
    %34 = arith.subf %24, %33 : vector<1x128xf32>
    %c0_i32_10 = arith.constant 0 : i32
    %35 = arith.cmpi eq, %arg0, %c0_i32_10 : i32
    %true = arith.constant true
    %36 = arith.xori %35, %true : i1
    %37 = arith.extui %36 : i1 to i32
    %c0_i32_11 = arith.constant 0 : i32
    %38 = arith.cmpi ne, %37, %c0_i32_11 : i32
    scf.if %38 {
      %cst = arith.constant dense<0.000000e+00> : vector<128xf32>
      %41 = vector.multi_reduction <add>, %34, %cst [0] : vector<1x128xf32> to vector<128xf32>
      %42 = vector.shape_cast %41 : vector<128xf32> to vector<1x128xf32>
      %c0_13 = arith.constant 0 : index
      %c0_14 = arith.constant 0 : index
      %43 = vector.load %arg3[%c0_13, %c0_14] : memref<1x128xf32, #tpu.memory_space<vmem>>, vector<1x128xf32>
      tpu.vector_store %arg3[%c0_13, %c0_14], %42 {strides = array<i32>} : memref<1x128xf32, #tpu.memory_space<vmem>>, vector<1x128xf32>,
    } else {
    }
    %39 = arith.extui %35 : i1 to i32
    %c0_i32_12 = arith.constant 0 : i32
    %40 = arith.cmpi ne, %39, %c0_i32_12 : i32
    scf.if %40 {
      %41 = tpu.iota {dimensions = array<i32: 0>} : vector<1x128xi32>
      %42 = tpu.iota {dimensions = array<i32: 1>} : vector<1x128xi32>
      %c128_i32 = arith.constant 128 : i32
      %43 = vector.broadcast %c128_i32 : i32 to vector<1x128xi32>
      %44 = arith.muli %41, %43 : vector<1x128xi32>
      %45 = arith.addi %44, %42 : vector<1x128xi32>
      %c8_i32 = arith.constant 8 : i32
      %46 = vector.broadcast %c8_i32 : i32 to vector<1x128xi32>
      %47 = arith.cmpi slt, %45, %46 : vector<1x128xi32>
      %cst = arith.constant 0.000000e+00 : f32
      %48 = vector.broadcast %cst : f32 to vector<1x128xf32>
      %49 = arith.select %47, %34, %48 : vector<1x128xi1>, vector<1x128xf32>
      %cst_13 = arith.constant dense<0.000000e+00> : vector<128xf32>
      %50 = vector.multi_reduction <add>, %49, %cst_13 [0] : vector<1x128xf32> to vector<128xf32>
      %51 = vector.shape_cast %50 : vector<128xf32> to vector<1x128xf32>
      %c0_14 = arith.constant 0 : index
      %c0_15 = arith.constant 0 : index
      %52 = vector.load %arg3[%c0_14, %c0_15] : memref<1x128xf32, #tpu.memory_space<vmem>>, vector<1x128xf32>
      tpu.vector_store %arg3[%c0_14, %c0_15], %51 {strides = array<i32>} : memref<1x128xf32, #tpu.memory_space<vmem>>, vector<1x128xf32>,
    } else {
    }
    return
  }
  func.func @transform_0(%arg0: i32) -> (i32, i32, i32) {
    %c0_i32 = arith.constant 0 : i32
    %c0_i32_0 = arith.constant 0 : i32
    %c0_i32_1 = arith.constant 0 : i32
    return %c0_i32, %arg0, %c0_i32_0 : i32, i32, i32
  }
  func.func @transform_1(%arg0: i32) -> (i32, i32) {
    %c0_i32 = arith.constant 0 : i32
    %c0_i32_0 = arith.constant 0 : i32
    return %arg0, %c0_i32 : i32, i32
  }
  func.func @transform_2(%arg0: i32) -> (i32, i32) {
    %c0_i32 = arith.constant 0 : i32
    %c0_i32_0 = arith.constant 0 : i32
    return %arg0, %c0_i32 : i32, i32
  }
}

</mosaic_0001>

<llo_original>
// kernel: tpu_custom_call.1
$region0: #{tpu_custom_call.1}
  #allocation0 [shape = 'u32[]', space=smem, size = 0x4, offset = 0x4, fixed_abs, tag = 'smem constant byte address 0x4 - core index']
  #allocation1 [shape = 'u32[72,128]{1,0:T(1,128)}', space=vmem, size = 0x9000, scoped, tag = 'internal scratch']
  %s0 = inlined_call_operand.hbm [shape: f32[4,1,128], index: 0, kind: input, shape index: {}]
  %s1 = inlined_call_operand.hbm [shape: s32[1,128], index: 1, kind: input, shape index: {}]
  %s2 = inlined_call_operand.hbm [shape: f32[1,128], index: 2, kind: output, shape index: {}]
  %s3 = sld [smem:[#allocation0]]
  $region34: #{tpu_custom_call.1} parent=0
    _
  %s5 = ssub.s32 1, %s3
  %s6 = scalar_select 0, %s5, %s3
  $region1: #{tpu_custom_call.1} parent=0
    #allocation2 [shape = 'u8[2048]{0}', space=vmem, size = 0x800, scoped, tag = 'input window, operand 0, single buffered']
    #allocation3 [shape = 's32[1]{0}', space=sflag, size = 0x4, scoped, tag = 'scoped memory for tpu_custom_call.1']
    #allocation4 [shape = 's32[1]{0}', space=sflag, size = 0x4, scoped, tag = 'scoped memory for tpu_custom_call.1']
    #allocation5 [shape = 'u8[512]{0}', space=vmem, size = 0x400, scoped, tag = 'input window, operand 1, single buffered']
    #allocation6 [shape = 's32[1]{0}', space=sflag, size = 0x4, scoped, tag = 'scoped memory for tpu_custom_call.1']
    #allocation7 [shape = 'u8[512]{0}', space=vmem, size = 0x400, scoped, tag = 'output window, operand 0, single buffered']
    %7 = vsyncpa [#allocation3], 0
    %8 = vsyncpa [#allocation6], 0
    %9 = vsyncpa [#allocation4], 0
    // Predicated region
    $region2: #{tpu_custom_call.1} parent=1 // pred_check
      _
    $region3: #{tpu_custom_call.1} parent=1 // pred_check_branch
      %11 = sbr.rel (0) target = $region5
    $region4: #{tpu_custom_call.1} parent=1 // pred_region
      %13 = vsyncadd [#allocation3], 0
      %s14 = sshll.u32 %s0, 4
      %s15 = int_to_ptr.hbm [resolvable:$true] %s14
      %s16 = sshll.u32 [#allocation2], 4
      %s17 = int_to_ptr.vmem [resolvable:$true] %s16
      %22 = dma.hbm_to_vmem [thread:$0]  %s15, 64, %s17, [#allocation3], 16, 16, 1
    $region5: #{tpu_custom_call.1} parent=1 // pred_fallthru
      _
    // Predicated region
    $region6: #{tpu_custom_call.1} parent=1 // pred_check
      _
    $region7: #{tpu_custom_call.1} parent=1 // pred_check_branch
      %24 = sbr.rel (0) target = $region9
    $region8: #{tpu_custom_call.1} parent=1 // pred_region
      %26 = vsyncadd [#allocation6], 0
      %s28 = sshll.u32 %s1, 4
      %s29 = int_to_ptr.hbm [resolvable:$true] %s28
      %s30 = sshll.u32 [#allocation5], 4
      %s31 = int_to_ptr.vmem [resolvable:$true] %s30
      %33 = dma.hbm_to_vmem [thread:$0]  %s29, 16, %s31, [#allocation6]
    $region9: #{tpu_custom_call.1} parent=1 // pred_fallthru
      _
    // Predicated region
    $region10: #{tpu_custom_call.1} parent=1 // pred_check
      _
    $region11: #{tpu_custom_call.1} parent=1 // pred_check_branch
      %35 = sbr.rel (0) target = $region13
    $region12: #{tpu_custom_call.1} parent=1 // pred_region
      %37 = dma.done [#allocation3], 64
    $region13: #{tpu_custom_call.1} parent=1 // pred_fallthru
      _
    // Predicated region
    $region14: #{tpu_custom_call.1} parent=1 // pred_check
      _
    $region15: #{tpu_custom_call.1} parent=1 // pred_check_branch
      %39 = sbr.rel (0) target = $region17
    $region16: #{tpu_custom_call.1} parent=1 // pred_region
      %41 = dma.done [#allocation6], 16
    $region17: #{tpu_custom_call.1} parent=1 // pred_fallthru
      _
    %v42 = vld [vmem:[#allocation2] sm:$0x1]
    %s43 = scalar_lea.vmem [#allocation2], 1
    %v44 = vld [vmem:[%s43] sm:$0x1]
    %s45 = scalar_lea.vmem [#allocation2], 2
    %v46 = vld [vmem:[%s45] sm:$0x1]
    %s47 = scalar_lea.vmem [#allocation2], 3
    %v48 = vld [vmem:[%s47] sm:$0x1]
    %v49 = vld [vmem:[#allocation5] sm:$0x1]
    %v50 = vmax.f32 %v42, %v44
    %v51 = vmax.f32 %v46, %v48
    %v52 = vmax.f32 %v50, %v51
    %v53 = vsub.f32 %v42, %v52
    %v54 = vmul.f32 %v53, 1.442695
    %v55 = vpow.pop %v54
    %v56 = vsub.f32 %v44, %v52
    %v57 = vmul.f32 %v56, 1.442695
    %v58 = vpow.pop %v57
    %v59 = vadd.f32 %v55, %v58
    %v60 = vsub.f32 %v46, %v52
    %v61 = vmul.f32 %v60, 1.442695
    %v62 = vpow.pop %v61
    %v63 = vadd.f32 %v59, %v62
    %v64 = vsub.f32 %v48, %v52
    %v65 = vmul.f32 %v64, 1.442695
    %v66 = vpow.pop %v65
    %v67 = vadd.f32 %v63, %v66
    %v68 = vlog2.pop %v67
    %v69 = vmul.f32 %v68, 0.6931472
    %v70 = vadd.f32 %v52, %v69
    %vm71 = vcmp.eq.s32.totalorder %v49, 0
    %vm72 = vcmp.eq.s32.totalorder %v49, 1
    %vm73 = vcmp.eq.s32.totalorder %v49, 2
    %v74 = vsel %vm73, %v46, %v48
    %v75 = vsel %vm72, %v44, %v74
    %v76 = vsel %vm71, %v42, %v75
    %v77 = vsub.f32 %v70, %v76
    %p78 = scmp.eq.s32.totalorder 0, 0
    %p79 = scmp.ne.s32.totalorder 0, 0
    // Predicated region
    $region18: #{tpu_custom_call.1} parent=1 // pred_check
      %p80 = pneg %p79
    $region19: #{tpu_custom_call.1} parent=1 // pred_check_branch
      %82 = sbr.rel (%p80) target = $region21
    $region20: #{tpu_custom_call.1} parent=1 // pred_region
      %v83 = vadd.f32 %v77, 0.0
      %84 = vst [vmem:[#allocation7] sm:$0x1] %v83
    $region21: #{tpu_custom_call.1} parent=1 // pred_fallthru
      _
    // Predicated region
    $region22: #{tpu_custom_call.1} parent=1 // pred_check
      %p85 = pneg %p78
    $region23: #{tpu_custom_call.1} parent=1 // pred_check_branch
      %87 = sbr.rel (%p85) target = $region25
    $region24: #{tpu_custom_call.1} parent=1 // pred_region
      %v88 = vlaneseq
      %v89 = vshrl.u32 %v88, 7
      %v90 = vlaneseq
      %v91 = vand.u32 %v90, 127
      %v92 = vmul.u32 %v89, 128
      %v93 = vadd.s32 %v92, %v91
      %vm94 = vcmp.lt.s32.totalorder %v93, 8
      %v95 = vsel %vm94, %v77, 0.0
      %v96 = vadd.f32 %v95, 0.0
      %97 = vst [vmem:[#allocation7] sm:$0x1] %v96
    $region25: #{tpu_custom_call.1} parent=1 // pred_fallthru
      _
    // Predicated region
    $region26: #{tpu_custom_call.1} parent=1 // pred_check
      _
    $region27: #{tpu_custom_call.1} parent=1 // pred_check_branch
      %99 = sbr.rel (0) target = $region29
    $region28: #{tpu_custom_call.1} parent=1 // pred_region
      %101 = vsyncadd [#allocation4], 0
      %s103 = sshll.u32 [#allocation7], 4
      %s104 = int_to_ptr.vmem [resolvable:$true] %s103
      %s105 = sshll.u32 %s2, 4
      %s106 = int_to_ptr.hbm [resolvable:$true] %s105
      %108 = dma.vmem_to_hbm [thread:$0]  %s104, 16, %s106, [#allocation4]
    $region29: #{tpu_custom_call.1} parent=1 // pred_fallthru
      _
    // Predicated region
    $region30: #{tpu_custom_call.1} parent=1 // pred_check
      _
    $region31: #{tpu_custom_call.1} parent=1 // pred_check_branch
      %110 = sbr.rel (0) target = $region33
    $region32: #{tpu_custom_call.1} parent=1 // pred_region
      %112 = dma.done [#allocation4], 16
    $region33: #{tpu_custom_call.1} parent=1 // pred_fallthru
      _
    %113 = vsyncpa [#allocation3], 1
    %114 = vsyncpa [#allocation6], 1
    %115 = vsyncpa [#allocation4], 1

</llo_original>
